<compile_context>
chip_gen: v7x
topology: tpu7x:2x2x1
jax: 0.10.0
libtpu: 0.0.40
codegen_flags: <defaults>
</compile_context>

<pallas_src>
import functools

import jax
import jax.numpy as jnp
from jax.experimental import pallas as pl
from jax.experimental.pallas import tpu as pltpu

# D2L's global dropout rates for this example.
DROPOUT1 = 0.2
DROPOUT2 = 0.5


def _round_up(x, m):
    return (x + m - 1) // m * m


def _random_u32(shape, seed_u32, salt, row_off_u32):
    """Counter-based per-element uint32 hash (portable: no TPU-only PRNG ops)."""
    rows = jax.lax.broadcasted_iota(jnp.int32, shape, 0).astype(jnp.uint32) + row_off_u32
    cols = jax.lax.broadcasted_iota(jnp.int32, shape, 1).astype(jnp.uint32)
    x = (rows * jnp.uint32(0x9E3779B9)
         + cols * jnp.uint32(0x85EBCA6B)
         + seed_u32
         + jnp.uint32(salt))
    # xxhash/murmur-style avalanche
    x = x ^ (x >> jnp.uint32(16))
    x = x * jnp.uint32(0x7FEB352D)
    x = x ^ (x >> jnp.uint32(15))
    x = x * jnp.uint32(0x846CA68B)
    x = x ^ (x >> jnp.uint32(16))
    return x


def _dropout(x, p, seed_u32, salt, row_off_u32):
    """In-kernel equivalent of dropout_layer(X, p): keep w.p. (1-p), scale by 1/(1-p)."""
    if p <= 0.0:
        return x
    if p >= 1.0:
        return jnp.zeros_like(x)
    bits = _random_u32(x.shape, seed_u32, salt, row_off_u32)
    thresh = jnp.uint32(int(p * (1 << 32)))          # keep iff bits >= thresh
    inv_keep = jnp.float32(1.0 / (1.0 - p))
    return jnp.where(bits >= thresh, x * inv_keep, jnp.float32(0.0))


def mlp_kernel(seed_ref, x_ref, w1_ref, b1_ref, w2_ref, b2_ref, w3_ref, b3_ref,
               out_ref, *, training, tile_b):
    seed_u32 = seed_ref[0].astype(jnp.uint32)
    row_off = (pl.program_id(0) * tile_b).astype(jnp.uint32)

    x = x_ref[...]                                   # (TB, num_inputs) bf16

    # Layer 1: Linear (bf16 MXU inputs, f32 accumulate) -> bias -> ReLU -> dropout
    h1 = jnp.dot(x, w1_ref[...], preferred_element_type=jnp.float32) + b1_ref[...]
    h1 = jnp.maximum(h1, 0.0)
    if training:
        h1 = _dropout(h1, DROPOUT1, seed_u32, 0x0BAD5EED, row_off)

    # Layer 2
    h2 = jnp.dot(h1.astype(w2_ref.dtype), w2_ref[...],
                 preferred_element_type=jnp.float32) + b2_ref[...]
    h2 = jnp.maximum(h2, 0.0)
    if training:
        h2 = _dropout(h2, DROPOUT2, seed_u32, 0x5EED0BAD, row_off)

    # Output layer (lane-padded to 128 columns)
    out = jnp.dot(h2.astype(w3_ref.dtype), w3_ref[...],
                  preferred_element_type=jnp.float32) + b3_ref[...]
    out_ref[...] = out.astype(out_ref.dtype)


def net_forward(x, params, seed, *, num_inputs, training=True):
    """Pallas implementation of Net.forward.

    x      : any shape whose trailing dims flatten to num_inputs per row (e.g. NCHW).
    params : dict of w1,b1,w2,b2,w3,b3 with weights stored as (in, out).
    seed   : int32 seed for the dropout masks.
    """
    x2d = x.reshape((-1, num_inputs))
    batch = x2d.shape[0]
    num_outputs = params["w3"].shape[1]

    # bf16 MXU inputs (f32 accumulation happens inside the kernel).
    x2d = x2d.astype(jnp.bfloat16)
    w1 = params["w1"].astype(jnp.bfloat16)
    w2 = params["w2"].astype(jnp.bfloat16)
    w3 = params["w3"].astype(jnp.bfloat16)
    b1 = params["b1"].astype(jnp.float32)
    b2 = params["b2"].astype(jnp.float32)
    b3 = params["b3"].astype(jnp.float32)

    # Lane-dense output: pad the (narrow) output feature dim up to 128 lanes.
    out_pad = _round_up(num_outputs, 128)
    if out_pad != num_outputs:
        w3 = jnp.pad(w3, ((0, 0), (0, out_pad - num_outputs)))
        b3 = jnp.pad(b3, ((0, 0), (0, out_pad - num_outputs)))

    # Batch tiling: weights stay resident; x / out stream through a 1-D grid.
    tile_b = min(512, _round_up(batch, 128))
    padded_batch = _round_up(batch, tile_b)
    if padded_batch != batch:
        x2d = jnp.pad(x2d, ((0, padded_batch - batch), (0, 0)))
    grid = (padded_batch // tile_b,)

    nh1 = w1.shape[1]
    nh2 = w2.shape[1]

    seed_arr = jnp.asarray([seed], dtype=jnp.int32)
    kernel = functools.partial(mlp_kernel, training=training, tile_b=tile_b)
    const = lambda i: (0, 0)

    out = pl.pallas_call(
        kernel,
        out_shape=jax.ShapeDtypeStruct((padded_batch, out_pad), jnp.float32),
        grid=grid,
        in_specs=[
            pl.BlockSpec(memory_space=pltpu.MemorySpace.SMEM),       # seed
            pl.BlockSpec((tile_b, num_inputs), lambda i: (i, 0)),    # x tile
            pl.BlockSpec((num_inputs, nh1), const),                  # w1 (resident)
            pl.BlockSpec((1, nh1), const),                           # b1
            pl.BlockSpec((nh1, nh2), const),                         # w2
            pl.BlockSpec((1, nh2), const),                           # b2
            pl.BlockSpec((nh2, out_pad), const),                     # w3 (padded)
            pl.BlockSpec((1, out_pad), const),                       # b3 (padded)
        ],
        out_specs=pl.BlockSpec((tile_b, out_pad), lambda i: (i, 0)),
        compiler_params=pltpu.CompilerParams(
            dimension_semantics=("parallel",),
            vmem_limit_bytes=32 * 1024 * 1024,   # budgeted for v7x's 64 MiB VMEM
        ),
    )(seed_arr, x2d, w1, b1, w2, b2, w3, b3)

    return out[:batch, :num_outputs]


def init_params(key, num_inputs, num_outputs, num_hiddens1, num_hiddens2):
    """Matches nn.Linear's default U(-1/sqrt(in), 1/sqrt(in)) init."""
    ks = jax.random.split(key, 6)

    def linear(kw, kb, fan_in, fan_out):
        bound = 1.0 / jnp.sqrt(jnp.asarray(fan_in, jnp.float32))
        w = jax.random.uniform(kw, (fan_in, fan_out), jnp.float32, -bound, bound)
        b = jax.random.uniform(kb, (1, fan_out), jnp.float32, -bound, bound)
        return w, b

    w1, b1 = linear(ks[0], ks[1], num_inputs, num_hiddens1)
    w2, b2 = linear(ks[2], ks[3], num_hiddens1, num_hiddens2)
    w3, b3 = linear(ks[4], ks[5], num_hiddens2, num_outputs)
    return {"w1": w1, "b1": b1, "w2": w2, "b2": b2, "w3": w3, "b3": b3}


def _reference_eval(x2d, params, num_outputs):
    """Pure-JAX eval-mode (no dropout) reference with the same bf16-in/f32-acc math."""
    xb = x2d.astype(jnp.bfloat16)
    h1 = jnp.maximum(
        jnp.dot(xb, params["w1"].astype(jnp.bfloat16),
                preferred_element_type=jnp.float32) + params["b1"], 0.0)
    h2 = jnp.maximum(
        jnp.dot(h1.astype(jnp.bfloat16), params["w2"].astype(jnp.bfloat16),
                preferred_element_type=jnp.float32) + params["b2"], 0.0)
    out = jnp.dot(h2.astype(jnp.bfloat16), params["w3"].astype(jnp.bfloat16),
                  preferred_element_type=jnp.float32) + params["b3"]
    return out[:, :num_outputs]


if __name__ == "__main__":
    key = jax.random.PRNGKey(0)
    k_x, k_p = jax.random.split(key)

    # Small, forward-consistent shapes: NCHW input flattened to num_inputs.
    batch, C, H, W = 8, 1, 16, 16
    num_inputs = C * H * W          # 256
    num_hiddens1 = 128
    num_hiddens2 = 128
    num_outputs = 10

    x = jax.random.normal(k_x, (batch, C, H, W), dtype=jnp.float32)
    params = init_params(k_p, num_inputs, num_outputs, num_hiddens1, num_hiddens2)

    # Training-mode forward (with in-kernel dropout).
    out_train = net_forward(x, params, seed=0, num_inputs=num_inputs, training=True)
    jax.block_until_ready(out_train)
    assert out_train.shape == (batch, num_outputs)
    assert bool(jnp.all(jnp.isfinite(out_train)))

    # Eval-mode forward checked against a pure-JAX reference (same dtype path).
    out_eval = net_forward(x, params, seed=0, num_inputs=num_inputs, training=False)
    ref_eval = _reference_eval(x.reshape((-1, num_inputs)), params, num_outputs)
    jax.block_until_ready(out_eval)
    assert out_eval.shape == (batch, num_outputs)
    assert bool(jnp.allclose(out_eval, ref_eval, rtol=1e-2, atol=1e-2))

    print("KERNEL_OK")
</pallas_src>

<mosaic_0001>
module attributes {stable_mosaic.version = 11 : i64} {
  func.func @mlp_kernel(%arg0: i32, %arg1: memref<1xi32, #tpu.memory_space<smem>>, %arg2: memref<128x256xbf16, #tpu.memory_space<vmem>>, %arg3: memref<256x128xbf16, #tpu.memory_space<vmem>>, %arg4: memref<1x128xf32, #tpu.memory_space<vmem>>, %arg5: memref<128x128xbf16, #tpu.memory_space<vmem>>, %arg6: memref<1x128xf32, #tpu.memory_space<vmem>>, %arg7: memref<128x128xbf16, #tpu.memory_space<vmem>>, %arg8: memref<1x128xf32, #tpu.memory_space<vmem>>, %arg9: memref<128x128xf32, #tpu.memory_space<vmem>>) attributes {dimension_semantics = [#tpu.dimension_semantics<parallel>], iteration_bounds = array<i64: 1>, scalar_prefetch = 0 : i64, scratch_operands = 0 : i64, tpu.core_type = #tpu.core_type<tc>, window_params = [{transform_indices = @transform_0, window_bounds = array<i64: 1>}, {transform_indices = @transform_1, window_bounds = array<i64: 128, 256>}, {pipeline_mode = #tpu.pipeline_mode<synchronous>, transform_indices = @transform_2, window_bounds = array<i64: 256, 128>}, {pipeline_mode = #tpu.pipeline_mode<synchronous>, transform_indices = @transform_3, window_bounds = array<i64: 1, 128>}, {pipeline_mode = #tpu.pipeline_mode<synchronous>, transform_indices = @transform_4, window_bounds = array<i64: 128, 128>}, {pipeline_mode = #tpu.pipeline_mode<synchronous>, transform_indices = @transform_5, window_bounds = array<i64: 1, 128>}, {pipeline_mode = #tpu.pipeline_mode<synchronous>, transform_indices = @transform_6, window_bounds = array<i64: 128, 128>}, {pipeline_mode = #tpu.pipeline_mode<synchronous>, transform_indices = @transform_7, window_bounds = array<i64: 1, 128>}, {transform_indices = @transform_8, window_bounds = array<i64: 128, 128>}]} {
    %c0 = arith.constant 0 : index
    %0 = memref.load %arg1[%c0] : memref<1xi32, #tpu.memory_space<smem>>
    %c128_i32 = arith.constant 128 : i32
    %1 = arith.muli %arg0, %c128_i32 : i32
    %c0_0 = arith.constant 0 : index
    %c0_1 = arith.constant 0 : index
    %2 = vector.load %arg2[%c0_0, %c0_1] : memref<128x256xbf16, #tpu.memory_space<vmem>>, vector<128x256xbf16>
    %c0_2 = arith.constant 0 : index
    %c0_3 = arith.constant 0 : index
    %3 = vector.load %arg3[%c0_2, %c0_3] : memref<256x128xbf16, #tpu.memory_space<vmem>>, vector<256x128xbf16>
    %cst = arith.constant dense<0.000000e+00> : vector<128x128xf32>
    %4 = tpu.matmul %2, %3, %cst {dimension_numbers = #tpu.dot_dimension_numbers<[1], [0], [0], [1], [0, 0, 1, 1], [], []>} : vector<128x256xbf16>, vector<256x128xbf16>, vector<128x128xf32> -> vector<128x128xf32>
    %c0_4 = arith.constant 0 : index
    %c0_5 = arith.constant 0 : index
    %5 = vector.load %arg4[%c0_4, %c0_5] : memref<1x128xf32, #tpu.memory_space<vmem>>, vector<1x128xf32>
    %6 = vector.broadcast %5 : vector<1x128xf32> to vector<128x128xf32>
    %7 = arith.addf %4, %6 : vector<128x128xf32>
    %cst_6 = arith.constant 0.000000e+00 : f32
    %8 = vector.broadcast %cst_6 : f32 to vector<128x128xf32>
    %9 = arith.maximumf %7, %8 : vector<128x128xf32>
    %10 = tpu.iota {dimensions = array<i32: 0>} : vector<128x128xi32>
    %11 = vector.broadcast %1 : i32 to vector<128x128xi32>
    %12 = arith.addi %10, %11 : vector<128x128xi32>
    %13 = tpu.iota {dimensions = array<i32: 1>} : vector<128x128xi32>
    %c-1640531527_i32 = arith.constant -1640531527 : i32
    %14 = vector.broadcast %c-1640531527_i32 : i32 to vector<128x128xi32>
    %15 = arith.muli %12, %14 : vector<128x128xi32>
    %c-2048144789_i32 = arith.constant -2048144789 : i32
    %16 = vector.broadcast %c-2048144789_i32 : i32 to vector<128x128xi32>
    %17 = arith.muli %13, %16 : vector<128x128xi32>
    %18 = arith.addi %15, %17 : vector<128x128xi32>
    %19 = vector.broadcast %0 : i32 to vector<128x128xi32>
    %20 = arith.addi %18, %19 : vector<128x128xi32>
    %c195911405_i32 = arith.constant 195911405 : i32
    %21 = vector.broadcast %c195911405_i32 : i32 to vector<128x128xi32>
    %22 = arith.addi %20, %21 : vector<128x128xi32>
    %c16_i32 = arith.constant 16 : i32
    %23 = vector.broadcast %c16_i32 : i32 to vector<128x128xi32>
    %24 = arith.shrui %22, %23 : vector<128x128xi32>
    %25 = arith.xori %22, %24 : vector<128x128xi32>
    %c2146121005_i32 = arith.constant 2146121005 : i32
    %26 = vector.broadcast %c2146121005_i32 : i32 to vector<128x128xi32>
    %27 = arith.muli %25, %26 : vector<128x128xi32>
    %c15_i32 = arith.constant 15 : i32
    %28 = vector.broadcast %c15_i32 : i32 to vector<128x128xi32>
    %29 = arith.shrui %27, %28 : vector<128x128xi32>
    %30 = arith.xori %27, %29 : vector<128x128xi32>
    %c-2073254261_i32 = arith.constant -2073254261 : i32
    %31 = vector.broadcast %c-2073254261_i32 : i32 to vector<128x128xi32>
    %32 = arith.muli %30, %31 : vector<128x128xi32>
    %c16_i32_7 = arith.constant 16 : i32
    %33 = vector.broadcast %c16_i32_7 : i32 to vector<128x128xi32>
    %34 = arith.shrui %32, %33 : vector<128x128xi32>
    %35 = arith.xori %32, %34 : vector<128x128xi32>
    %c858993459_i32 = arith.constant 858993459 : i32
    %36 = vector.broadcast %c858993459_i32 : i32 to vector<128x128xi32>
    %37 = arith.cmpi uge, %35, %36 : vector<128x128xi32>
    %cst_8 = arith.constant 1.250000e+00 : f32
    %38 = vector.broadcast %cst_8 : f32 to vector<128x128xf32>
    %39 = arith.mulf %9, %38 : vector<128x128xf32>
    %cst_9 = arith.constant 0.000000e+00 : f32
    %40 = vector.broadcast %cst_9 : f32 to vector<128x128xf32>
    %41 = arith.select %37, %39, %40 : vector<128x128xi1>, vector<128x128xf32>
    %42 = arith.truncf %41 : vector<128x128xf32> to vector<128x128xbf16>
    %c0_10 = arith.constant 0 : index
    %c0_11 = arith.constant 0 : index
    %43 = vector.load %arg5[%c0_10, %c0_11] : memref<128x128xbf16, #tpu.memory_space<vmem>>, vector<128x128xbf16>
    %cst_12 = arith.constant dense<0.000000e+00> : vector<128x128xf32>
    %44 = tpu.matmul %42, %43, %cst_12 {dimension_numbers = #tpu.dot_dimension_numbers<[1], [0], [0], [1], [0, 0, 1, 1], [], []>} : vector<128x128xbf16>, vector<128x128xbf16>, vector<128x128xf32> -> vector<128x128xf32>
    %c0_13 = arith.constant 0 : index
    %c0_14 = arith.constant 0 : index
    %45 = vector.load %arg6[%c0_13, %c0_14] : memref<1x128xf32, #tpu.memory_space<vmem>>, vector<1x128xf32>
    %46 = vector.broadcast %45 : vector<1x128xf32> to vector<128x128xf32>
    %47 = arith.addf %44, %46 : vector<128x128xf32>
    %cst_15 = arith.constant 0.000000e+00 : f32
    %48 = vector.broadcast %cst_15 : f32 to vector<128x128xf32>
    %49 = arith.maximumf %47, %48 : vector<128x128xf32>
    %50 = tpu.iota {dimensions = array<i32: 0>} : vector<128x128xi32>
    %51 = vector.broadcast %1 : i32 to vector<128x128xi32>
    %52 = arith.addi %50, %51 : vector<128x128xi32>
    %53 = tpu.iota {dimensions = array<i32: 1>} : vector<128x128xi32>
    %c-1640531527_i32_16 = arith.constant -1640531527 : i32
    %54 = vector.broadcast %c-1640531527_i32_16 : i32 to vector<128x128xi32>
    %55 = arith.muli %52, %54 : vector<128x128xi32>
    %c-2048144789_i32_17 = arith.constant -2048144789 : i32
    %56 = vector.broadcast %c-2048144789_i32_17 : i32 to vector<128x128xi32>
    %57 = arith.muli %53, %56 : vector<128x128xi32>
    %58 = arith.addi %55, %57 : vector<128x128xi32>
    %59 = vector.broadcast %0 : i32 to vector<128x128xi32>
    %60 = arith.addi %58, %59 : vector<128x128xi32>
    %c1592593325_i32 = arith.constant 1592593325 : i32
    %61 = vector.broadcast %c1592593325_i32 : i32 to vector<128x128xi32>
    %62 = arith.addi %60, %61 : vector<128x128xi32>
    %c16_i32_18 = arith.constant 16 : i32
    %63 = vector.broadcast %c16_i32_18 : i32 to vector<128x128xi32>
    %64 = arith.shrui %62, %63 : vector<128x128xi32>
    %65 = arith.xori %62, %64 : vector<128x128xi32>
    %c2146121005_i32_19 = arith.constant 2146121005 : i32
    %66 = vector.broadcast %c2146121005_i32_19 : i32 to vector<128x128xi32>
    %67 = arith.muli %65, %66 : vector<128x128xi32>
    %c15_i32_20 = arith.constant 15 : i32
    %68 = vector.broadcast %c15_i32_20 : i32 to vector<128x128xi32>
    %69 = arith.shrui %67, %68 : vector<128x128xi32>
    %70 = arith.xori %67, %69 : vector<128x128xi32>
    %c-2073254261_i32_21 = arith.constant -2073254261 : i32
    %71 = vector.broadcast %c-2073254261_i32_21 : i32 to vector<128x128xi32>
    %72 = arith.muli %70, %71 : vector<128x128xi32>
    %c16_i32_22 = arith.constant 16 : i32
    %73 = vector.broadcast %c16_i32_22 : i32 to vector<128x128xi32>
    %74 = arith.shrui %72, %73 : vector<128x128xi32>
    %75 = arith.xori %72, %74 : vector<128x128xi32>
    %c-2147483648_i32 = arith.constant -2147483648 : i32
    %76 = vector.broadcast %c-2147483648_i32 : i32 to vector<128x128xi32>
    %77 = arith.cmpi uge, %75, %76 : vector<128x128xi32>
    %cst_23 = arith.constant 2.000000e+00 : f32
    %78 = vector.broadcast %cst_23 : f32 to vector<128x128xf32>
    %79 = arith.mulf %49, %78 : vector<128x128xf32>
    %cst_24 = arith.constant 0.000000e+00 : f32
    %80 = vector.broadcast %cst_24 : f32 to vector<128x128xf32>
    %81 = arith.select %77, %79, %80 : vector<128x128xi1>, vector<128x128xf32>
    %82 = arith.truncf %81 : vector<128x128xf32> to vector<128x128xbf16>
    %c0_25 = arith.constant 0 : index
    %c0_26 = arith.constant 0 : index
    %83 = vector.load %arg7[%c0_25, %c0_26] : memref<128x128xbf16, #tpu.memory_space<vmem>>, vector<128x128xbf16>
    %cst_27 = arith.constant dense<0.000000e+00> : vector<128x128xf32>
    %84 = tpu.matmul %82, %83, %cst_27 {dimension_numbers = #tpu.dot_dimension_numbers<[1], [0], [0], [1], [0, 0, 1, 1], [], []>} : vector<128x128xbf16>, vector<128x128xbf16>, vector<128x128xf32> -> vector<128x128xf32>
    %c0_28 = arith.constant 0 : index
    %c0_29 = arith.constant 0 : index
    %85 = vector.load %arg8[%c0_28, %c0_29] : memref<1x128xf32, #tpu.memory_space<vmem>>, vector<1x128xf32>
    %86 = vector.broadcast %85 : vector<1x128xf32> to vector<128x128xf32>
    %87 = arith.addf %84, %86 : vector<128x128xf32>
    %c0_30 = arith.constant 0 : index
    %c0_31 = arith.constant 0 : index
    %88 = vector.load %arg9[%c0_30, %c0_31] : memref<128x128xf32, #tpu.memory_space<vmem>>, vector<128x128xf32>
    tpu.vector_store %arg9[%c0_30, %c0_31], %87 {strides = array<i32>} : memref<128x128xf32, #tpu.memory_space<vmem>>, vector<128x128xf32>,
    return
  }
  func.func @transform_0(%arg0: i32) -> i32 {
    %c0_i32 = arith.constant 0 : i32
    %c0_i32_0 = arith.constant 0 : i32
    return %c0_i32 : i32
  }
  func.func @transform_1(%arg0: i32) -> (i32, i32) {
    %c0_i32 = arith.constant 0 : i32
    %c0_i32_0 = arith.constant 0 : i32
    return %arg0, %c0_i32 : i32, i32
  }
  func.func @transform_2(%arg0: i32) -> (i32, i32) {
    %c0_i32 = arith.constant 0 : i32
    %c0_i32_0 = arith.constant 0 : i32
    %c0_i32_1 = arith.constant 0 : i32
    return %c0_i32, %c0_i32_0 : i32, i32
  }
  func.func @transform_3(%arg0: i32) -> (i32, i32) {
    %c0_i32 = arith.constant 0 : i32
    %c0_i32_0 = arith.constant 0 : i32
    %c0_i32_1 = arith.constant 0 : i32
    return %c0_i32, %c0_i32_0 : i32, i32
  }
  func.func @transform_4(%arg0: i32) -> (i32, i32) {
    %c0_i32 = arith.constant 0 : i32
    %c0_i32_0 = arith.constant 0 : i32
    %c0_i32_1 = arith.constant 0 : i32
    return %c0_i32, %c0_i32_0 : i32, i32
  }
  func.func @transform_5(%arg0: i32) -> (i32, i32) {
    %c0_i32 = arith.constant 0 : i32
    %c0_i32_0 = arith.constant 0 : i32
    %c0_i32_1 = arith.constant 0 : i32
    return %c0_i32, %c0_i32_0 : i32, i32
  }
  func.func @transform_6(%arg0: i32) -> (i32, i32) {
    %c0_i32 = arith.constant 0 : i32
    %c0_i32_0 = arith.constant 0 : i32
    %c0_i32_1 = arith.constant 0 : i32
    return %c0_i32, %c0_i32_0 : i32, i32
  }
  func.func @transform_7(%arg0: i32) -> (i32, i32) {
    %c0_i32 = arith.constant 0 : i32
    %c0_i32_0 = arith.constant 0 : i32
    %c0_i32_1 = arith.constant 0 : i32
    return %c0_i32, %c0_i32_0 : i32, i32
  }
  func.func @transform_8(%arg0: i32) -> (i32, i32) {
    %c0_i32 = arith.constant 0 : i32
    %c0_i32_0 = arith.constant 0 : i32
    return %arg0, %c0_i32 : i32, i32
  }
}

</mosaic_0001>

<llo_original>
// kernel: tpu_custom_call.1
$region0: #{tpu_custom_call.1}
  #allocation0 [shape = 'u32[]', space=smem, size = 0x4, offset = 0x4, fixed_abs, tag = 'smem constant byte address 0x4 - core index']
  #allocation1 [shape = 'u32[144,128]{1,0:T(1,128)}', space=vmem, size = 0x12000, scoped, tag = 'internal scratch']
  #allocation2 [shape = 's32[1]{0:T(128)S(6)}', space=smem, size = 0x200, scoped, tag = 'scoped memory for tpu_custom_call.1']
  %s0 = inlined_call_operand.<no memory space> [shape: s32[1], index: 0, kind: input, shape index: {}]
  %s1 = inlined_call_operand.hbm [shape: bf16[128,256], index: 1, kind: input, shape index: {}]
  %s2 = inlined_call_operand.hbm [shape: bf16[256,128], index: 2, kind: input, shape index: {}]
  %s3 = inlined_call_operand.vmem [shape: f32[1,128], index: 3, kind: input, shape index: {}]
  %s4 = inlined_call_operand.hbm [shape: bf16[128,128], index: 4, kind: input, shape index: {}]
  %s5 = inlined_call_operand.vmem [shape: f32[1,128], index: 5, kind: input, shape index: {}]
  %s6 = inlined_call_operand.hbm [shape: bf16[128,128], index: 6, kind: input, shape index: {}]
  %s7 = inlined_call_operand.vmem [shape: f32[1,128], index: 7, kind: input, shape index: {}]
  %s8 = inlined_call_operand.hbm [shape: f32[128,128], index: 8, kind: output, shape index: {}]
  %s9 = sld [smem:[#allocation0]]
  $region58: #{tpu_custom_call.1} parent=0
    _
  %s11 = ssub.s32 1, %s9
  %s12 = scalar_select 0, %s11, %s9
  %13 = sst [smem:[#allocation2]] %s0
  $region1: #{tpu_custom_call.1} parent=0
    #allocation3 [shape = 'u8[65536]{0}', space=vmem, size = 0x10000, scoped, tag = 'input window, operand 1, single buffered']
    #allocation4 [shape = 's32[1]{0}', space=sflag, size = 0x4, scoped, tag = 'scoped memory for tpu_custom_call.1']
    #allocation5 [shape = 's32[1]{0}', space=sflag, size = 0x4, scoped, tag = 'scoped memory for tpu_custom_call.1']
    #allocation6 [shape = 'u8[65536]{0}', space=vmem, size = 0x10000, scoped, tag = 'input window, operand 2, single buffered']
    #allocation7 [shape = 's32[1]{0}', space=sflag, size = 0x4, scoped, tag = 'scoped memory for tpu_custom_call.1']
    #allocation8 [shape = 'u8[32768]{0}', space=vmem, size = 0x8000, scoped, tag = 'input window, operand 4, single buffered']
    #allocation9 [shape = 'u8[32768]{0}', space=vmem, size = 0x8000, scoped, tag = 'input window, operand 6, single buffered']
    #allocation10 [shape = 's32[1]{0}', space=sflag, size = 0x4, scoped, tag = 'scoped memory for tpu_custom_call.1']
    #allocation11 [shape = 'u8[65536]{0}', space=vmem, size = 0x10000, scoped, tag = 'output window, operand 0, single buffered']
    %14 = vsyncpa [#allocation4], 0
    %15 = vsyncpa [#allocation7], 0
    %16 = vsyncpa [#allocation10], 0
    %17 = vsyncpa [#allocation5], 0
    // Predicated region
    $region2: #{tpu_custom_call.1} parent=1 // pred_check
      _
    $region3: #{tpu_custom_call.1} parent=1 // pred_check_branch
      %19 = sbr.rel (0) target = $region5
    $region4: #{tpu_custom_call.1} parent=1 // pred_region
      _
    $region5: #{tpu_custom_call.1} parent=1 // pred_fallthru
      _
    // Predicated region
    $region6: #{tpu_custom_call.1} parent=1 // pred_check
      _
    $region7: #{tpu_custom_call.1} parent=1 // pred_check_branch
      %21 = sbr.rel (0) target = $region9
    $region8: #{tpu_custom_call.1} parent=1 // pred_region
      %s23 = ssub.s32 2048, 2048
      %24 = vsyncadd [#allocation4], %s23
      %s25 = sshll.u32 [#allocation3], 4
      %s26 = int_to_ptr.vmem [resolvable:$true] %s25
      %31 = dma.hbm_to_vmem [thread:$0]  %s1, 2048, %s26, [#allocation4], 128, 128, 8
    $region9: #{tpu_custom_call.1} parent=1 // pred_fallthru
      _
    // Predicated region
    $region10: #{tpu_custom_call.1} parent=1 // pred_check
      _
    $region11: #{tpu_custom_call.1} parent=1 // pred_check_branch
      %33 = sbr.rel (0) target = $region13
    $region12: #{tpu_custom_call.1} parent=1 // pred_region
      %s35 = ssub.s32 2048, 2048
      %36 = vsyncadd [#allocation7], %s35
      %s37 = sshll.u32 [#allocation6], 4
      %s38 = int_to_ptr.vmem [resolvable:$true] %s37
      %43 = dma.hbm_to_vmem [thread:$0]  %s2, 2048, %s38, [#allocation7], 64, 64, 4
    $region13: #{tpu_custom_call.1} parent=1 // pred_fallthru
      _
    // Predicated region
    $region14: #{tpu_custom_call.1} parent=1 // pred_check
      _
    $region15: #{tpu_custom_call.1} parent=1 // pred_check_branch
      %45 = sbr.rel (0) target = $region17
    $region16: #{tpu_custom_call.1} parent=1 // pred_region
      _
    $region17: #{tpu_custom_call.1} parent=1 // pred_fallthru
      _
    // Predicated region
    $region18: #{tpu_custom_call.1} parent=1 // pred_check
      _
    $region19: #{tpu_custom_call.1} parent=1 // pred_check_branch
      %47 = sbr.rel (0) target = $region21
    $region20: #{tpu_custom_call.1} parent=1 // pred_region
      %s49 = ssub.s32 1024, 1024
      %50 = vsyncadd [#allocation7], %s49
      %s51 = sshll.u32 [#allocation8], 4
      %s52 = int_to_ptr.vmem [resolvable:$true] %s51
      %57 = dma.hbm_to_vmem [thread:$0]  %s4, 1024, %s52, [#allocation7], 64, 64, 4
    $region21: #{tpu_custom_call.1} parent=1 // pred_fallthru
      _
    // Predicated region
    $region22: #{tpu_custom_call.1} parent=1 // pred_check
      _
    $region23: #{tpu_custom_call.1} parent=1 // pred_check_branch
      %59 = sbr.rel (0) target = $region25
    $region24: #{tpu_custom_call.1} parent=1 // pred_region
      _
    $region25: #{tpu_custom_call.1} parent=1 // pred_fallthru
      _
    // Predicated region
    $region26: #{tpu_custom_call.1} parent=1 // pred_check
      _
    $region27: #{tpu_custom_call.1} parent=1 // pred_check_branch
      %61 = sbr.rel (0) target = $region29
    $region28: #{tpu_custom_call.1} parent=1 // pred_region
      %s63 = ssub.s32 1024, 1024
      %64 = vsyncadd [#allocation10], %s63
      %s65 = sshll.u32 [#allocation9], 4
      %s66 = int_to_ptr.vmem [resolvable:$true] %s65
      %71 = dma.hbm_to_vmem [thread:$0]  %s6, 1024, %s66, [#allocation10], 64, 64, 4
    $region29: #{tpu_custom_call.1} parent=1 // pred_fallthru
      _
    // Predicated region
    $region30: #{tpu_custom_call.1} parent=1 // pred_check
      _
    $region31: #{tpu_custom_call.1} parent=1 // pred_check_branch
      %73 = sbr.rel (0) target = $region33
    $region32: #{tpu_custom_call.1} parent=1 // pred_region
      _
    $region33: #{tpu_custom_call.1} parent=1 // pred_fallthru
      _
    // Predicated region
    $region34: #{tpu_custom_call.1} parent=1 // pred_check
      _
    $region35: #{tpu_custom_call.1} parent=1 // pred_check_branch
      %75 = sbr.rel (0) target = $region37
    $region36: #{tpu_custom_call.1} parent=1 // pred_region
      %76 = dma.done [#allocation4], 2048
    $region37: #{tpu_custom_call.1} parent=1 // pred_fallthru
      _
    // Predicated region
    $region38: #{tpu_custom_call.1} parent=1 // pred_check
      _
    $region39: #{tpu_custom_call.1} parent=1 // pred_check_branch
      %78 = sbr.rel (0) target = $region41
    $region40: #{tpu_custom_call.1} parent=1 // pred_region
      %79 = dma.done [#allocation7], 2048
    $region41: #{tpu_custom_call.1} parent=1 // pred_fallthru
      _
    // Predicated region
    $region42: #{tpu_custom_call.1} parent=1 // pred_check
      _
    $region43: #{tpu_custom_call.1} parent=1 // pred_check_branch
      %81 = sbr.rel (0) target = $region45
    $region44: #{tpu_custom_call.1} parent=1 // pred_region
      %82 = dma.done [#allocation7], 1024
    $region45: #{tpu_custom_call.1} parent=1 // pred_fallthru
      _
    // Predicated region
    $region46: #{tpu_custom_call.1} parent=1 // pred_check
      _
    $region47: #{tpu_custom_call.1} parent=1 // pred_check_branch
      %84 = sbr.rel (0) target = $region49
    $region48: #{tpu_custom_call.1} parent=1 // pred_region
      %85 = dma.done [#allocation10], 1024
    $region49: #{tpu_custom_call.1} parent=1 // pred_fallthru
      _
    %s87 = sld [smem:[#allocation2]]
    %s88 = smul.u32 0, 128
    %v89 = vld [vmem:[#allocation3] sm:$0xff]
    %v90 = vld [vmem:[#allocation3 + $0x8] sm:$0xff]
    %v91 = vld [vmem:[#allocation3 + $0x10] sm:$0xff]
    %v92 = vld [vmem:[#allocation3 + $0x18] sm:$0xff]
    %v93 = vld [vmem:[#allocation3 + $0x20] sm:$0xff]
    %v94 = vld [vmem:[#allocation3 + $0x28] sm:$0xff]
    %v95 = vld [vmem:[#allocation3 + $0x30] sm:$0xff]
    %v96 = vld [vmem:[#allocation3 + $0x38] sm:$0xff]
    %v97 = vld [vmem:[#allocation3 + $0x40] sm:$0xff]
    %v98 = vld [vmem:[#allocation3 + $0x48] sm:$0xff]
    %v99 = vld [vmem:[#allocation3 + $0x50] sm:$0xff]
    %v100 = vld [vmem:[#allocation3 + $0x58] sm:$0xff]
    %v101 = vld [vmem:[#allocation3 + $0x60] sm:$0xff]
    %v102 = vld [vmem:[#allocation3 + $0x68] sm:$0xff]
    %v103 = vld [vmem:[#allocation3 + $0x70] sm:$0xff]
    %v104 = vld [vmem:[#allocation3 + $0x78] sm:$0xff]
    %v105 = vld [vmem:[#allocation6] sm:$0xf]
    %v106 = vld [vmem:[#allocation6 + $0x4] sm:$0xf]
    %v107 = vld [vmem:[#allocation6 + $0x8] sm:$0xf]
    %v108 = vld [vmem:[#allocation6 + $0xc] sm:$0xf]
    %v109 = vld [vmem:[#allocation6 + $0x10] sm:$0xf]
    %v110 = vld [vmem:[#allocation6 + $0x14] sm:$0xf]
    %v111 = vld [vmem:[#allocation6 + $0x18] sm:$0xf]
    %v112 = vld [vmem:[#allocation6 + $0x1c] sm:$0xf]
    %v113 = vld [vmem:[#allocation6 + $0x20] sm:$0xf]
    %v114 = vld [vmem:[#allocation6 + $0x24] sm:$0xf]
    %v115 = vld [vmem:[#allocation6 + $0x28] sm:$0xf]
    %v116 = vld [vmem:[#allocation6 + $0x2c] sm:$0xf]
    %v117 = vld [vmem:[#allocation6 + $0x30] sm:$0xf]
    %v118 = vld [vmem:[#allocation6 + $0x34] sm:$0xf]
    %v119 = vld [vmem:[#allocation6 + $0x38] sm:$0xf]
    %v120 = vld [vmem:[#allocation6 + $0x3c] sm:$0xf]
    %v121 = vld [vmem:[#allocation6 + $0x40] sm:$0xf]
    %v122 = vld [vmem:[#allocation6 + $0x44] sm:$0xf]
    %v123 = vld [vmem:[#allocation6 + $0x48] sm:$0xf]
    %v124 = vld [vmem:[#allocation6 + $0x4c] sm:$0xf]
    %v125 = vld [vmem:[#allocation6 + $0x50] sm:$0xf]
    %v126 = vld [vmem:[#allocation6 + $0x54] sm:$0xf]
    %v127 = vld [vmem:[#allocation6 + $0x58] sm:$0xf]
    %v128 = vld [vmem:[#allocation6 + $0x5c] sm:$0xf]
    %v129 = vld [vmem:[#allocation6 + $0x60] sm:$0xf]
    %v130 = vld [vmem:[#allocation6 + $0x64] sm:$0xf]
    %v131 = vld [vmem:[#allocation6 + $0x68] sm:$0xf]
    %v132 = vld [vmem:[#allocation6 + $0x6c] sm:$0xf]
    %v133 = vld [vmem:[#allocation6 + $0x70] sm:$0xf]
    %v134 = vld [vmem:[#allocation6 + $0x74] sm:$0xf]
    %v135 = vld [vmem:[#allocation6 + $0x78] sm:$0xf]
    %v136 = vld [vmem:[#allocation6 + $0x7c] sm:$0xf]
    %v137 = vld [vmem:[%s3] sm:$0x1]
    %v139 = vlaneseq
    %v140 = vshrl.u32 %v139, 7
    %v141 = vsub.s32 0, %v140
    %v142 = vrot.slane %v137, %v141
    %v160 = vunpack.c.l.b16 %v89
    %v161 = vunpack.c.h.b16 %v89
    %v162 = vunpack.c.l.b16 %v90
    %v163 = vunpack.c.h.b16 %v90
    %v164 = vunpack.c.l.b16 %v91
    %v165 = vunpack.c.h.b16 %v91
    %v166 = vunpack.c.l.b16 %v92
    %v167 = vunpack.c.h.b16 %v92
    %v168 = vunpack.c.l.b16 %v93
    %v169 = vunpack.c.h.b16 %v93
    %v170 = vunpack.c.l.b16 %v94
    %v171 = vunpack.c.h.b16 %v94
    %v172 = vunpack.c.l.b16 %v95
    %v173 = vunpack.c.h.b16 %v95
    %v174 = vunpack.c.l.b16 %v96
    %v175 = vunpack.c.h.b16 %v96
    %v176 = vunpack.c.l.b16 %v97
    %v177 = vunpack.c.h.b16 %v97
    %v178 = vunpack.c.l.b16 %v98
    %v179 = vunpack.c.h.b16 %v98
    %v180 = vunpack.c.l.b16 %v99
    %v181 = vunpack.c.h.b16 %v99
    %v182 = vunpack.c.l.b16 %v100
    %v183 = vunpack.c.h.b16 %v100
    %v184 = vunpack.c.l.b16 %v101
    %v185 = vunpack.c.h.b16 %v101
    %v186 = vunpack.c.l.b16 %v102
    %v187 = vunpack.c.h.b16 %v102
    %v188 = vunpack.c.l.b16 %v103
    %v189 = vunpack.c.h.b16 %v103
    %v190 = vunpack.c.l.b16 %v104
    %v191 = vunpack.c.h.b16 %v104
    %v192 = vpack.c.b16 %v162, %v160
    %v193 = vpack.c.b16 %v163, %v161
    %v194 = vpack.c.b16 %v166, %v164
    %v195 = vpack.c.b16 %v167, %v165
    %v196 = vpack.c.b16 %v170, %v168
    %v197 = vpack.c.b16 %v171, %v169
    %v198 = vpack.c.b16 %v174, %v172
    %v199 = vpack.c.b16 %v175, %v173
    %v200 = vpack.c.b16 %v178, %v176
    %v201 = vpack.c.b16 %v179, %v177
    %v202 = vpack.c.b16 %v182, %v180
    %v203 = vpack.c.b16 %v183, %v181
    %v204 = vpack.c.b16 %v186, %v184
    %v205 = vpack.c.b16 %v187, %v185
    %v206 = vpack.c.b16 %v190, %v188
    %v207 = vpack.c.b16 %v191, %v189
    %v256 = vunpack.c.l.b16 %v105
    %v257 = vunpack.c.l.b16 %v106
    %v258 = vunpack.c.l.b16 %v107
    %v259 = vunpack.c.l.b16 %v108
    %v260 = vunpack.c.l.b16 %v109
    %v261 = vunpack.c.l.b16 %v110
    %v262 = vunpack.c.l.b16 %v111
    %v263 = vunpack.c.l.b16 %v112
    %v264 = vunpack.c.l.b16 %v113
    %v265 = vunpack.c.l.b16 %v114
    %v266 = vunpack.c.l.b16 %v115
    %v267 = vunpack.c.l.b16 %v116
    %v268 = vunpack.c.l.b16 %v117
    %v269 = vunpack.c.l.b16 %v118
    %v270 = vunpack.c.l.b16 %v119
    %v271 = vunpack.c.l.b16 %v120
    %v272 = vunpack.c.l.b16 %v121
    %v273 = vunpack.c.l.b16 %v122
    %v274 = vunpack.c.l.b16 %v123
    %v275 = vunpack.c.l.b16 %v124
    %v276 = vunpack.c.l.b16 %v125
    %v277 = vunpack.c.l.b16 %v126
    %v278 = vunpack.c.l.b16 %v127
    %v279 = vunpack.c.l.b16 %v128
    %v280 = vunpack.c.l.b16 %v129
    %v281 = vunpack.c.l.b16 %v130
    %v282 = vunpack.c.l.b16 %v131
    %v283 = vunpack.c.l.b16 %v132
    %v284 = vunpack.c.l.b16 %v133
    %v285 = vunpack.c.l.b16 %v134
    %v286 = vunpack.c.l.b16 %v135
    %v287 = vunpack.c.l.b16 %v136
    %v288 = vpack.c.b16 %v257, %v256
    %v289 = vpack.c.b16 %v259, %v258
    %v290 = vpack.c.b16 %v261, %v260
    %v291 = vpack.c.b16 %v263, %v262
    %v292 = vpack.c.b16 %v265, %v264
    %v293 = vpack.c.b16 %v267, %v266
    %v294 = vpack.c.b16 %v269, %v268
    %v295 = vpack.c.b16 %v271, %v270
    %v296 = vpack.c.b16 %v273, %v272
    %v297 = vpack.c.b16 %v275, %v274
    %v298 = vpack.c.b16 %v277, %v276
    %v299 = vpack.c.b16 %v279, %v278
    %v300 = vpack.c.b16 %v281, %v280
    %v301 = vpack.c.b16 %v283, %v282
    %v302 = vpack.c.b16 %v285, %v284
    %v303 = vpack.c.b16 %v287, %v286
    %320 = vmatprep.subr.bf16.mxu0 0
    %321 = vmatpush1.bf16.msra.mxu0 %v288
    %322 = vmatprep.subr.bf16.mxu0 0
    %323 = vmatpush1.bf16.msra.mxu0 %v289
    %324 = vmatprep.subr.bf16.mxu0 0
    %325 = vmatpush1.bf16.msra.mxu0 %v290
    %326 = vmatprep.subr.bf16.mxu0 0
    %327 = vmatpush1.bf16.msra.mxu0 %v291
    %328 = vmatprep.subr.bf16.mxu0 0
    %329 = vmatpush1.bf16.msra.mxu0 %v292
    %330 = vmatprep.subr.bf16.mxu0 0
    %331 = vmatpush1.bf16.msra.mxu0 %v293
    %332 = vmatprep.subr.bf16.mxu0 0
    %333 = vmatpush1.bf16.msra.mxu0 %v294
    %334 = vmatprep.subr.bf16.mxu0 0
    %335 = vmatpush1.bf16.msra.mxu0 %v295
    %336 = vmatprep.subr.bf16.mxu0 0
    %337 = vmatpush1.bf16.msra.mxu0 %v296
    %338 = vmatprep.subr.bf16.mxu0 0
    %339 = vmatpush1.bf16.msra.mxu0 %v297
    %340 = vmatprep.subr.bf16.mxu0 0
    %341 = vmatpush1.bf16.msra.mxu0 %v298
    %342 = vmatprep.subr.bf16.mxu0 0
    %343 = vmatpush1.bf16.msra.mxu0 %v299
    %344 = vmatprep.subr.bf16.mxu0 0
    %345 = vmatpush1.bf16.msra.mxu0 %v300
    %346 = vmatprep.subr.bf16.mxu0 0
    %347 = vmatpush1.bf16.msra.mxu0 %v301
    %348 = vmatprep.subr.bf16.mxu0 0
    %349 = vmatpush1.bf16.msra.mxu0 %v302
    %350 = vmatprep.subr.bf16.mxu0 0
    %351 = vmatpush1.bf16.msra.mxu0 %v303
    %352 = vmatprep.mubr.bf16.mxu0 %v193
    %353 = vmatmul.mubr.bf16.gmra.mrb[0].mxu0 %v192
    %v354 = vpop.f32.mrb[0].mxu0
    %v355 = vadd.f32 %v142, %v354
    %v356 = vpop.f32.mrb[0].mxu0
    %v357 = vpop.f32.mrb[0].mxu0
    %v358 = vadd.f32 %v142, %v357
    %v359 = vpop.f32.mrb[0].mxu0
    %360 = vmatprep.mubr.bf16.mxu0 %v195
    %361 = vmatmul.mubr.bf16.gmra.mrb[0].mxu0 %v194
    %v362 = vpop.f32.mrb[0].mxu0
    %v363 = vadd.f32 %v142, %v362
    %v364 = vpop.f32.mrb[0].mxu0
    %v365 = vpop.f32.mrb[0].mxu0
    %v366 = vadd.f32 %v142, %v365
    %v367 = vpop.f32.mrb[0].mxu0
    %368 = vmatprep.mubr.bf16.mxu0 %v197
    %369 = vmatmul.mubr.bf16.gmra.mrb[0].mxu0 %v196
    %v370 = vpop.f32.mrb[0].mxu0
    %v371 = vadd.f32 %v142, %v370
    %v372 = vpop.f32.mrb[0].mxu0
    %v373 = vpop.f32.mrb[0].mxu0
    %v374 = vadd.f32 %v142, %v373
    %v375 = vpop.f32.mrb[0].mxu0
    %376 = vmatprep.mubr.bf16.mxu0 %v199
    %377 = vmatmul.mubr.bf16.gmra.mrb[0].mxu0 %v198
    %v378 = vpop.f32.mrb[0].mxu0
    %v379 = vadd.f32 %v142, %v378
    %v380 = vpop.f32.mrb[0].mxu0
    %v381 = vpop.f32.mrb[0].mxu0
    %v382 = vadd.f32 %v142, %v381
    %v383 = vpop.f32.mrb[0].mxu0
    %384 = vmatprep.mubr.bf16.mxu0 %v201
    %385 = vmatmul.mubr.bf16.gmra.mrb[0].mxu0 %v200
    %v386 = vpop.f32.mrb[0].mxu0
    %v387 = vadd.f32 %v142, %v386
    %v388 = vpop.f32.mrb[0].mxu0
    %v389 = vpop.f32.mrb[0].mxu0
    %v390 = vadd.f32 %v142, %v389
    %v391 = vpop.f32.mrb[0].mxu0
    %392 = vmatprep.mubr.bf16.mxu0 %v203
    %393 = vmatmul.mubr.bf16.gmra.mrb[0].mxu0 %v202
    %v394 = vpop.f32.mrb[0].mxu0
    %v395 = vadd.f32 %v142, %v394
    %v396 = vpop.f32.mrb[0].mxu0
    %v397 = vpop.f32.mrb[0].mxu0
    %v398 = vadd.f32 %v142, %v397
    %v399 = vpop.f32.mrb[0].mxu0
    %400 = vmatprep.mubr.bf16.mxu0 %v205
    %401 = vmatmul.mubr.bf16.gmra.mrb[0].mxu0 %v204
    %v402 = vpop.f32.mrb[0].mxu0
    %v403 = vadd.f32 %v142, %v402
    %v404 = vpop.f32.mrb[0].mxu0
    %v405 = vpop.f32.mrb[0].mxu0
    %v406 = vadd.f32 %v142, %v405
    %v407 = vpop.f32.mrb[0].mxu0
    %408 = vmatprep.mubr.bf16.mxu0 %v207
    %409 = vmatmul.mubr.bf16.gmra.mrb[0].mxu0 %v206
    %v410 = vpop.f32.mrb[0].mxu0
    %v411 = vadd.f32 %v142, %v410
    %v412 = vpop.f32.mrb[0].mxu0
    %v413 = vpop.f32.mrb[0].mxu0
    %v414 = vadd.f32 %v142, %v413
    %v415 = vpop.f32.mrb[0].mxu0
    %416 = vdwg.mxu0
    %v417 = vmax.f32 %v355, 0.0
    %v418 = vmax.f32 %v358, 0.0
    %v419 = vmax.f32 %v363, 0.0
    %v420 = vmax.f32 %v366, 0.0
    %v421 = vmax.f32 %v371, 0.0
    %v422 = vmax.f32 %v374, 0.0
    %v423 = vmax.f32 %v379, 0.0
    %v424 = vmax.f32 %v382, 0.0
    %v425 = vmax.f32 %v387, 0.0
    %v426 = vmax.f32 %v390, 0.0
    %v427 = vmax.f32 %v395, 0.0
    %v428 = vmax.f32 %v398, 0.0
    %v429 = vmax.f32 %v403, 0.0
    %v430 = vmax.f32 %v406, 0.0
    %v431 = vmax.f32 %v411, 0.0
    %v432 = vmax.f32 %v414, 0.0
    %v433 = vlaneseq
    %v434 = vshrl.u32 %v433, 7
    %v435 = vadd.s32 %v434, 8
    %v436 = vadd.s32 %v434, 16
    %v437 = vadd.s32 %v434, 24
    %v438 = vadd.s32 %v434, 32
    %v439 = vadd.s32 %v434, 40
    %v440 = vadd.s32 %v434, 48
    %v441 = vadd.s32 %v434, 56
    %v442 = vadd.s32 %v434, 64
    %v443 = vadd.s32 %v434, 72
    %v444 = vadd.s32 %v434, 80
    %v445 = vadd.s32 %v434, 88
    %v446 = vadd.s32 %v434, 96
    %v447 = vadd.s32 %v434, 104
    %v448 = vadd.s32 %v434, 112
    %v449 = vadd.s32 %v434, 120
    %v450 = vstv %s88
    %v451 = vadd.s32 %v434, %v450
    %v452 = vadd.s32 %v435, %v450
    %v453 = vadd.s32 %v436, %v450
    %v454 = vadd.s32 %v437, %v450
    %v455 = vadd.s32 %v438, %v450
    %v456 = vadd.s32 %v439, %v450
    %v457 = vadd.s32 %v440, %v450
    %v458 = vadd.s32 %v441, %v450
    %v459 = vadd.s32 %v442, %v450
    %v460 = vadd.s32 %v443, %v450
    %v461 = vadd.s32 %v444, %v450
    %v462 = vadd.s32 %v445, %v450
    %v463 = vadd.s32 %v446, %v450
    %v464 = vadd.s32 %v447, %v450
    %v465 = vadd.s32 %v448, %v450
    %v466 = vadd.s32 %v449, %v450
    %v467 = vlaneseq
    %v468 = vand.u32 %v467, 127
    %v469 = vmul.u32 %v451, 2654435769
    %v470 = vmul.u32 %v452, 2654435769
    %v471 = vmul.u32 %v453, 2654435769
    %v472 = vmul.u32 %v454, 2654435769
    %v473 = vmul.u32 %v455, 2654435769
    %v474 = vmul.u32 %v456, 2654435769
    %v475 = vmul.u32 %v457, 2654435769
    %v476 = vmul.u32 %v458, 2654435769
    %v477 = vmul.u32 %v459, 2654435769
    %v478 = vmul.u32 %v460, 2654435769
    %v479 = vmul.u32 %v461, 2654435769
    %v480 = vmul.u32 %v462, 2654435769
    %v481 = vmul.u32 %v463, 2654435769
    %v482 = vmul.u32 %v464, 2654435769
    %v483 = vmul.u32 %v465, 2654435769
    %v484 = vmul.u32 %v466, 2654435769
    %v485 = vmul.u32 %v468, 2246822507
    %v486 = vadd.s32 %v469, %v485
    %v487 = vadd.s32 %v470, %v485
    %v488 = vadd.s32 %v471, %v485
    %v489 = vadd.s32 %v472, %v485
    %v490 = vadd.s32 %v473, %v485
    %v491 = vadd.s32 %v474, %v485
    %v492 = vadd.s32 %v475, %v485
    %v493 = vadd.s32 %v476, %v485
    %v494 = vadd.s32 %v477, %v485
    %v495 = vadd.s32 %v478, %v485
    %v496 = vadd.s32 %v479, %v485
    %v497 = vadd.s32 %v480, %v485
    %v498 = vadd.s32 %v481, %v485
    %v499 = vadd.s32 %v482, %v485
    %v500 = vadd.s32 %v483, %v485
    %v501 = vadd.s32 %v484, %v485
    %v502 = vstv %s87
    %v503 = vadd.s32 %v486, %v502
    %v504 = vadd.s32 %v487, %v502
    %v505 = vadd.s32 %v488, %v502
    %v506 = vadd.s32 %v489, %v502
    %v507 = vadd.s32 %v490, %v502
    %v508 = vadd.s32 %v491, %v502
    %v509 = vadd.s32 %v492, %v502
    %v510 = vadd.s32 %v493, %v502
    %v511 = vadd.s32 %v494, %v502
    %v512 = vadd.s32 %v495, %v502
    %v513 = vadd.s32 %v496, %v502
    %v514 = vadd.s32 %v497, %v502
    %v515 = vadd.s32 %v498, %v502
    %v516 = vadd.s32 %v499, %v502
    %v517 = vadd.s32 %v500, %v502
    %v518 = vadd.s32 %v501, %v502
    %v519 = vadd.s32 %v503, 195911405
    %v520 = vadd.s32 %v504, 195911405
    %v521 = vadd.s32 %v505, 195911405
    %v522 = vadd.s32 %v506, 195911405
    %v523 = vadd.s32 %v507, 195911405
    %v524 = vadd.s32 %v508, 195911405
    %v525 = vadd.s32 %v509, 195911405
    %v526 = vadd.s32 %v510, 195911405
    %v527 = vadd.s32 %v511, 195911405
    %v528 = vadd.s32 %v512, 195911405
    %v529 = vadd.s32 %v513, 195911405
    %v530 = vadd.s32 %v514, 195911405
    %v531 = vadd.s32 %v515, 195911405
    %v532 = vadd.s32 %v516, 195911405
    %v533 = vadd.s32 %v517, 195911405
    %v534 = vadd.s32 %v518, 195911405
    %v535 = vshrl.u32 %v519, 16
    %v536 = vshrl.u32 %v520, 16
    %v537 = vshrl.u32 %v521, 16
    %v538 = vshrl.u32 %v522, 16
    %v539 = vshrl.u32 %v523, 16
    %v540 = vshrl.u32 %v524, 16
    %v541 = vshrl.u32 %v525, 16
    %v542 = vshrl.u32 %v526, 16
    %v543 = vshrl.u32 %v527, 16
    %v544 = vshrl.u32 %v528, 16
    %v545 = vshrl.u32 %v529, 16
    %v546 = vshrl.u32 %v530, 16
    %v547 = vshrl.u32 %v531, 16
    %v548 = vshrl.u32 %v532, 16
    %v549 = vshrl.u32 %v533, 16
    %v550 = vshrl.u32 %v534, 16
    %v551 = vxor.u32 %v519, %v535
    %v552 = vxor.u32 %v520, %v536
    %v553 = vxor.u32 %v521, %v537
    %v554 = vxor.u32 %v522, %v538
    %v555 = vxor.u32 %v523, %v539
    %v556 = vxor.u32 %v524, %v540
    %v557 = vxor.u32 %v525, %v541
    %v558 = vxor.u32 %v526, %v542
    %v559 = vxor.u32 %v527, %v543
    %v560 = vxor.u32 %v528, %v544
    %v561 = vxor.u32 %v529, %v545
    %v562 = vxor.u32 %v530, %v546
    %v563 = vxor.u32 %v531, %v547
    %v564 = vxor.u32 %v532, %v548
    %v565 = vxor.u32 %v533, %v549
    %v566 = vxor.u32 %v534, %v550
    %v567 = vmul.u32 %v551, 2146121005
    %v568 = vmul.u32 %v552, 2146121005
    %v569 = vmul.u32 %v553, 2146121005
    %v570 = vmul.u32 %v554, 2146121005
    %v571 = vmul.u32 %v555, 2146121005
    %v572 = vmul.u32 %v556, 2146121005
    %v573 = vmul.u32 %v557, 2146121005
    %v574 = vmul.u32 %v558, 2146121005
    %v575 = vmul.u32 %v559, 2146121005
    %v576 = vmul.u32 %v560, 2146121005
    %v577 = vmul.u32 %v561, 2146121005
    %v578 = vmul.u32 %v562, 2146121005
    %v579 = vmul.u32 %v563, 2146121005
    %v580 = vmul.u32 %v564, 2146121005
    %v581 = vmul.u32 %v565, 2146121005
    %v582 = vmul.u32 %v566, 2146121005
    %v583 = vshrl.u32 %v567, 15
    %v584 = vshrl.u32 %v568, 15
    %v585 = vshrl.u32 %v569, 15
    %v586 = vshrl.u32 %v570, 15
    %v587 = vshrl.u32 %v571, 15
    %v588 = vshrl.u32 %v572, 15
    %v589 = vshrl.u32 %v573, 15
    %v590 = vshrl.u32 %v574, 15
    %v591 = vshrl.u32 %v575, 15
    %v592 = vshrl.u32 %v576, 15
    %v593 = vshrl.u32 %v577, 15
    %v594 = vshrl.u32 %v578, 15
    %v595 = vshrl.u32 %v579, 15
    %v596 = vshrl.u32 %v580, 15
    %v597 = vshrl.u32 %v581, 15
    %v598 = vshrl.u32 %v582, 15
    %v599 = vxor.u32 %v567, %v583
    %v600 = vxor.u32 %v568, %v584
    %v601 = vxor.u32 %v569, %v585
    %v602 = vxor.u32 %v570, %v586
    %v603 = vxor.u32 %v571, %v587
    %v604 = vxor.u32 %v572, %v588
    %v605 = vxor.u32 %v573, %v589
    %v606 = vxor.u32 %v574, %v590
    %v607 = vxor.u32 %v575, %v591
    %v608 = vxor.u32 %v576, %v592
    %v609 = vxor.u32 %v577, %v593
    %v610 = vxor.u32 %v578, %v594
    %v611 = vxor.u32 %v579, %v595
    %v612 = vxor.u32 %v580, %v596
    %v613 = vxor.u32 %v581, %v597
    %v614 = vxor.u32 %v582, %v598
    %v615 = vmul.u32 %v599, 2221713035
    %v616 = vmul.u32 %v600, 2221713035
    %v617 = vmul.u32 %v601, 2221713035
    %v618 = vmul.u32 %v602, 2221713035
    %v619 = vmul.u32 %v603, 2221713035
    %v620 = vmul.u32 %v604, 2221713035
    %v621 = vmul.u32 %v605, 2221713035
    %v622 = vmul.u32 %v606, 2221713035
    %v623 = vmul.u32 %v607, 2221713035
    %v624 = vmul.u32 %v608, 2221713035
    %v625 = vmul.u32 %v609, 2221713035
    %v626 = vmul.u32 %v610, 2221713035
    %v627 = vmul.u32 %v611, 2221713035
    %v628 = vmul.u32 %v612, 2221713035
    %v629 = vmul.u32 %v613, 2221713035
    %v630 = vmul.u32 %v614, 2221713035
    %v631 = vshrl.u32 %v615, 16
    %v632 = vshrl.u32 %v616, 16
    %v633 = vshrl.u32 %v617, 16
    %v634 = vshrl.u32 %v618, 16
    %v635 = vshrl.u32 %v619, 16
    %v636 = vshrl.u32 %v620, 16
    %v637 = vshrl.u32 %v621, 16
    %v638 = vshrl.u32 %v622, 16
    %v639 = vshrl.u32 %v623, 16
    %v640 = vshrl.u32 %v624, 16
    %v641 = vshrl.u32 %v625, 16
    %v642 = vshrl.u32 %v626, 16
    %v643 = vshrl.u32 %v627, 16
    %v644 = vshrl.u32 %v628, 16
    %v645 = vshrl.u32 %v629, 16
    %v646 = vshrl.u32 %v630, 16
    %v647 = vxor.u32 %v615, %v631
    %v648 = vxor.u32 %v616, %v632
    %v649 = vxor.u32 %v617, %v633
    %v650 = vxor.u32 %v618, %v634
    %v651 = vxor.u32 %v619, %v635
    %v652 = vxor.u32 %v620, %v636
    %v653 = vxor.u32 %v621, %v637
    %v654 = vxor.u32 %v622, %v638
    %v655 = vxor.u32 %v623, %v639
    %v656 = vxor.u32 %v624, %v640
    %v657 = vxor.u32 %v625, %v641
    %v658 = vxor.u32 %v626, %v642
    %v659 = vxor.u32 %v627, %v643
    %v660 = vxor.u32 %v628, %v644
    %v661 = vxor.u32 %v629, %v645
    %v662 = vxor.u32 %v630, %v646
    %vm663 = vcmp.ge.u32.totalorder %v647, 858993459
    %vm664 = vcmp.ge.u32.totalorder %v648, 858993459
    %vm665 = vcmp.ge.u32.totalorder %v649, 858993459
    %vm666 = vcmp.ge.u32.totalorder %v650, 858993459
    %vm667 = vcmp.ge.u32.totalorder %v651, 858993459
    %vm668 = vcmp.ge.u32.totalorder %v652, 858993459
    %vm669 = vcmp.ge.u32.totalorder %v653, 858993459
    %vm670 = vcmp.ge.u32.totalorder %v654, 858993459
    %vm671 = vcmp.ge.u32.totalorder %v655, 858993459
    %vm672 = vcmp.ge.u32.totalorder %v656, 858993459
    %vm673 = vcmp.ge.u32.totalorder %v657, 858993459
    %vm674 = vcmp.ge.u32.totalorder %v658, 858993459
    %vm675 = vcmp.ge.u32.totalorder %v659, 858993459
    %vm676 = vcmp.ge.u32.totalorder %v660, 858993459
    %vm677 = vcmp.ge.u32.totalorder %v661, 858993459
    %vm678 = vcmp.ge.u32.totalorder %v662, 858993459
    %v679 = vmul.f32 %v417, 1.25
    %v680 = vmul.f32 %v418, 1.25
    %v681 = vmul.f32 %v419, 1.25
    %v682 = vmul.f32 %v420, 1.25
    %v683 = vmul.f32 %v421, 1.25
    %v684 = vmul.f32 %v422, 1.25
    %v685 = vmul.f32 %v423, 1.25
    %v686 = vmul.f32 %v424, 1.25
    %v687 = vmul.f32 %v425, 1.25
    %v688 = vmul.f32 %v426, 1.25
    %v689 = vmul.f32 %v427, 1.25
    %v690 = vmul.f32 %v428, 1.25
    %v691 = vmul.f32 %v429, 1.25
    %v692 = vmul.f32 %v430, 1.25
    %v693 = vmul.f32 %v431, 1.25
    %v694 = vmul.f32 %v432, 1.25
    %v695 = vsel %vm663, %v679, 0.0
    %v696 = vsel %vm664, %v680, 0.0
    %v697 = vsel %vm665, %v681, 0.0
    %v698 = vsel %vm666, %v682, 0.0
    %v699 = vsel %vm667, %v683, 0.0
    %v700 = vsel %vm668, %v684, 0.0
    %v701 = vsel %vm669, %v685, 0.0
    %v702 = vsel %vm670, %v686, 0.0
    %v703 = vsel %vm671, %v687, 0.0
    %v704 = vsel %vm672, %v688, 0.0
    %v705 = vsel %vm673, %v689, 0.0
    %v706 = vsel %vm674, %v690, 0.0
    %v707 = vsel %vm675, %v691, 0.0
    %v708 = vsel %vm676, %v692, 0.0
    %v709 = vsel %vm677, %v693, 0.0
    %v710 = vsel %vm678, %v694, 0.0
    %v711 = vpack.c.bf16 %v696, %v695
    %v712 = vpack.c.bf16 %v698, %v697
    %v713 = vpack.c.bf16 %v700, %v699
    %v714 = vpack.c.bf16 %v702, %v701
    %v715 = vpack.c.bf16 %v704, %v703
    %v716 = vpack.c.bf16 %v706, %v705
    %v717 = vpack.c.bf16 %v708, %v707
    %v718 = vpack.c.bf16 %v710, %v709
    %v719 = vld [vmem:[#allocation8] sm:$0xf]
    %v720 = vld [vmem:[#allocation8 + $0x4] sm:$0xf]
    %v721 = vld [vmem:[#allocation8 + $0x8] sm:$0xf]
    %v722 = vld [vmem:[#allocation8 + $0xc] sm:$0xf]
    %v723 = vld [vmem:[#allocation8 + $0x10] sm:$0xf]
    %v724 = vld [vmem:[#allocation8 + $0x14] sm:$0xf]
    %v725 = vld [vmem:[#allocation8 + $0x18] sm:$0xf]
    %v726 = vld [vmem:[#allocation8 + $0x1c] sm:$0xf]
    %v727 = vld [vmem:[#allocation8 + $0x20] sm:$0xf]
    %v728 = vld [vmem:[#allocation8 + $0x24] sm:$0xf]
    %v729 = vld [vmem:[#allocation8 + $0x28] sm:$0xf]
    %v730 = vld [vmem:[#allocation8 + $0x2c] sm:$0xf]
    %v731 = vld [vmem:[#allocation8 + $0x30] sm:$0xf]
    %v732 = vld [vmem:[#allocation8 + $0x34] sm:$0xf]
    %v733 = vld [vmem:[#allocation8 + $0x38] sm:$0xf]
    %v734 = vld [vmem:[#allocation8 + $0x3c] sm:$0xf]
    %v735 = vld [vmem:[%s5] sm:$0x1]
    %v737 = vlaneseq
    %v738 = vshrl.u32 %v737, 7
    %v739 = vsub.s32 0, %v738
    %v740 = vrot.slane %v735, %v739
    %v758 = vunpack.c.l.b16 %v719
    %v759 = vunpack.c.l.b16 %v720
    %v760 = vunpack.c.l.b16 %v721
    %v761 = vunpack.c.l.b16 %v722
    %v762 = vunpack.c.l.b16 %v723
    %v763 = vunpack.c.l.b16 %v724
    %v764 = vunpack.c.l.b16 %v725
    %v765 = vunpack.c.l.b16 %v726
    %v766 = vunpack.c.l.b16 %v727
    %v767 = vunpack.c.l.b16 %v728
    %v768 = vunpack.c.l.b16 %v729
    %v769 = vunpack.c.l.b16 %v730
    %v770 = vunpack.c.l.b16 %v731
    %v771 = vunpack.c.l.b16 %v732
    %v772 = vunpack.c.l.b16 %v733
    %v773 = vunpack.c.l.b16 %v734
    %v774 = vpack.c.b16 %v759, %v758
    %v775 = vpack.c.b16 %v761, %v760
    %v776 = vpack.c.b16 %v763, %v762
    %v777 = vpack.c.b16 %v765, %v764
    %v778 = vpack.c.b16 %v767, %v766
    %v779 = vpack.c.b16 %v769, %v768
    %v780 = vpack.c.b16 %v771, %v770
    %v781 = vpack.c.b16 %v773, %v772
    %790 = vmatprep.subr.bf16.mxu0 0
    %791 = vmatpush1.bf16.msra.mxu0 %v774
    %792 = vmatprep.subr.bf16.mxu0 0
    %793 = vmatpush1.bf16.msra.mxu0 %v775
    %794 = vmatprep.subr.bf16.mxu0 0
    %795 = vmatpush1.bf16.msra.mxu0 %v776
    %796 = vmatprep.subr.bf16.mxu0 0
    %797 = vmatpush1.bf16.msra.mxu0 %v777
    %798 = vmatprep.subr.bf16.mxu0 0
    %799 = vmatpush1.bf16.msra.mxu0 %v778
    %800 = vmatprep.subr.bf16.mxu0 0
    %801 = vmatpush1.bf16.msra.mxu0 %v779
    %802 = vmatprep.subr.bf16.mxu0 0
    %803 = vmatpush1.bf16.msra.mxu0 %v780
    %804 = vmatprep.subr.bf16.mxu0 0
    %805 = vmatpush1.bf16.msra.mxu0 %v781
    %806 = vmatprep.subr.bf16.mxu0 0
    %807 = vmatpush1.bf16.msra.mxu0 0
    %808 = vmatprep.subr.bf16.mxu0 0
    %809 = vmatpush1.bf16.msra.mxu0 0
    %810 = vmatprep.subr.bf16.mxu0 0
    %811 = vmatpush1.bf16.msra.mxu0 0
    %812 = vmatprep.subr.bf16.mxu0 0
    %813 = vmatpush1.bf16.msra.mxu0 0
    %814 = vmatprep.subr.bf16.mxu0 0
    %815 = vmatpush1.bf16.msra.mxu0 0
    %816 = vmatprep.subr.bf16.mxu0 0
    %817 = vmatpush1.bf16.msra.mxu0 0
    %818 = vmatprep.subr.bf16.mxu0 0
    %819 = vmatpush1.bf16.msra.mxu0 0
    %820 = vmatprep.subr.bf16.mxu0 0
    %821 = vmatpush1.bf16.msra.mxu0 0
    %822 = vmatprep.mubr.bf16.mxu0 0
    %823 = vmatmul.mubr.bf16.gmra.mrb[0].mxu0 %v711
    %v824 = vpop.f32.mrb[0].mxu0
    %v825 = vadd.f32 %v740, %v824
    %v826 = vpop.f32.mrb[0].mxu0
    %v827 = vpop.f32.mrb[0].mxu0
    %v828 = vadd.f32 %v740, %v827
    %v829 = vpop.f32.mrb[0].mxu0
    %830 = vmatprep.mubr.bf16.mxu0 0
    %831 = vmatmul.mubr.bf16.gmra.mrb[0].mxu0 %v712
    %v832 = vpop.f32.mrb[0].mxu0
    %v833 = vadd.f32 %v740, %v832
    %v834 = vpop.f32.mrb[0].mxu0
    %v835 = vpop.f32.mrb[0].mxu0
    %v836 = vadd.f32 %v740, %v835
    %v837 = vpop.f32.mrb[0].mxu0
    %838 = vmatprep.mubr.bf16.mxu0 0
    %839 = vmatmul.mubr.bf16.gmra.mrb[0].mxu0 %v713
    %v840 = vpop.f32.mrb[0].mxu0
    %v841 = vadd.f32 %v740, %v840
    %v842 = vpop.f32.mrb[0].mxu0
    %v843 = vpop.f32.mrb[0].mxu0
    %v844 = vadd.f32 %v740, %v843
    %v845 = vpop.f32.mrb[0].mxu0
    %846 = vmatprep.mubr.bf16.mxu0 0
    %847 = vmatmul.mubr.bf16.gmra.mrb[0].mxu0 %v714
    %v848 = vpop.f32.mrb[0].mxu0
    %v849 = vadd.f32 %v740, %v848
    %v850 = vpop.f32.mrb[0].mxu0
    %v851 = vpop.f32.mrb[0].mxu0
    %v852 = vadd.f32 %v740, %v851
    %v853 = vpop.f32.mrb[0].mxu0
    %854 = vmatprep.mubr.bf16.mxu0 0
    %855 = vmatmul.mubr.bf16.gmra.mrb[0].mxu0 %v715
    %v856 = vpop.f32.mrb[0].mxu0
    %v857 = vadd.f32 %v740, %v856
    %v858 = vpop.f32.mrb[0].mxu0
    %v859 = vpop.f32.mrb[0].mxu0
    %v860 = vadd.f32 %v740, %v859
    %v861 = vpop.f32.mrb[0].mxu0
    %862 = vmatprep.mubr.bf16.mxu0 0
    %863 = vmatmul.mubr.bf16.gmra.mrb[0].mxu0 %v716
    %v864 = vpop.f32.mrb[0].mxu0
    %v865 = vadd.f32 %v740, %v864
    %v866 = vpop.f32.mrb[0].mxu0
    %v867 = vpop.f32.mrb[0].mxu0
    %v868 = vadd.f32 %v740, %v867
    %v869 = vpop.f32.mrb[0].mxu0
    %870 = vmatprep.mubr.bf16.mxu0 0
    %871 = vmatmul.mubr.bf16.gmra.mrb[0].mxu0 %v717
    %v872 = vpop.f32.mrb[0].mxu0
    %v873 = vadd.f32 %v740, %v872
    %v874 = vpop.f32.mrb[0].mxu0
    %v875 = vpop.f32.mrb[0].mxu0
    %v876 = vadd.f32 %v740, %v875
    %v877 = vpop.f32.mrb[0].mxu0
    %878 = vmatprep.mubr.bf16.mxu0 0
    %879 = vmatmul.mubr.bf16.gmra.mrb[0].mxu0 %v718
    %v880 = vpop.f32.mrb[0].mxu0
    %v881 = vadd.f32 %v740, %v880
    %v882 = vpop.f32.mrb[0].mxu0
    %v883 = vpop.f32.mrb[0].mxu0
    %v884 = vadd.f32 %v740, %v883
    %v885 = vpop.f32.mrb[0].mxu0
    %886 = vdwg.mxu0
    %v887 = vmax.f32 %v825, 0.0
    %v888 = vmax.f32 %v828, 0.0
    %v889 = vmax.f32 %v833, 0.0
    %v890 = vmax.f32 %v836, 0.0
    %v891 = vmax.f32 %v841, 0.0
    %v892 = vmax.f32 %v844, 0.0
    %v893 = vmax.f32 %v849, 0.0
    %v894 = vmax.f32 %v852, 0.0
    %v895 = vmax.f32 %v857, 0.0
    %v896 = vmax.f32 %v860, 0.0
    %v897 = vmax.f32 %v865, 0.0
    %v898 = vmax.f32 %v868, 0.0
    %v899 = vmax.f32 %v873, 0.0
    %v900 = vmax.f32 %v876, 0.0
    %v901 = vmax.f32 %v881, 0.0
    %v902 = vmax.f32 %v884, 0.0
    %v903 = vadd.s32 %v503, 1592593325
    %v904 = vadd.s32 %v504, 1592593325
    %v905 = vadd.s32 %v505, 1592593325
    %v906 = vadd.s32 %v506, 1592593325
    %v907 = vadd.s32 %v507, 1592593325
    %v908 = vadd.s32 %v508, 1592593325
    %v909 = vadd.s32 %v509, 1592593325
    %v910 = vadd.s32 %v510, 1592593325
    %v911 = vadd.s32 %v511, 1592593325
    %v912 = vadd.s32 %v512, 1592593325
    %v913 = vadd.s32 %v513, 1592593325
    %v914 = vadd.s32 %v514, 1592593325
    %v915 = vadd.s32 %v515, 1592593325
    %v916 = vadd.s32 %v516, 1592593325
    %v917 = vadd.s32 %v517, 1592593325
    %v918 = vadd.s32 %v518, 1592593325
    %v919 = vshrl.u32 %v903, 16
    %v920 = vshrl.u32 %v904, 16
    %v921 = vshrl.u32 %v905, 16
    %v922 = vshrl.u32 %v906, 16
    %v923 = vshrl.u32 %v907, 16
    %v924 = vshrl.u32 %v908, 16
    %v925 = vshrl.u32 %v909, 16
    %v926 = vshrl.u32 %v910, 16
    %v927 = vshrl.u32 %v911, 16
    %v928 = vshrl.u32 %v912, 16
    %v929 = vshrl.u32 %v913, 16
    %v930 = vshrl.u32 %v914, 16
    %v931 = vshrl.u32 %v915, 16
    %v932 = vshrl.u32 %v916, 16
    %v933 = vshrl.u32 %v917, 16
    %v934 = vshrl.u32 %v918, 16
    %v935 = vxor.u32 %v903, %v919
    %v936 = vxor.u32 %v904, %v920
    %v937 = vxor.u32 %v905, %v921
    %v938 = vxor.u32 %v906, %v922
    %v939 = vxor.u32 %v907, %v923
    %v940 = vxor.u32 %v908, %v924
    %v941 = vxor.u32 %v909, %v925
    %v942 = vxor.u32 %v910, %v926
    %v943 = vxor.u32 %v911, %v927
    %v944 = vxor.u32 %v912, %v928
    %v945 = vxor.u32 %v913, %v929
    %v946 = vxor.u32 %v914, %v930
    %v947 = vxor.u32 %v915, %v931
    %v948 = vxor.u32 %v916, %v932
    %v949 = vxor.u32 %v917, %v933
    %v950 = vxor.u32 %v918, %v934
    %v951 = vmul.u32 %v935, 2146121005
    %v952 = vmul.u32 %v936, 2146121005
    %v953 = vmul.u32 %v937, 2146121005
    %v954 = vmul.u32 %v938, 2146121005
    %v955 = vmul.u32 %v939, 2146121005
    %v956 = vmul.u32 %v940, 2146121005
    %v957 = vmul.u32 %v941, 2146121005
    %v958 = vmul.u32 %v942, 2146121005
    %v959 = vmul.u32 %v943, 2146121005
    %v960 = vmul.u32 %v944, 2146121005
    %v961 = vmul.u32 %v945, 2146121005
    %v962 = vmul.u32 %v946, 2146121005
    %v963 = vmul.u32 %v947, 2146121005
    %v964 = vmul.u32 %v948, 2146121005
    %v965 = vmul.u32 %v949, 2146121005
    %v966 = vmul.u32 %v950, 2146121005
    %v967 = vshrl.u32 %v951, 15
    %v968 = vshrl.u32 %v952, 15
    %v969 = vshrl.u32 %v953, 15
    %v970 = vshrl.u32 %v954, 15
    %v971 = vshrl.u32 %v955, 15
    %v972 = vshrl.u32 %v956, 15
    %v973 = vshrl.u32 %v957, 15
    %v974 = vshrl.u32 %v958, 15
    %v975 = vshrl.u32 %v959, 15
    %v976 = vshrl.u32 %v960, 15
    %v977 = vshrl.u32 %v961, 15
    %v978 = vshrl.u32 %v962, 15
    %v979 = vshrl.u32 %v963, 15
    %v980 = vshrl.u32 %v964, 15
    %v981 = vshrl.u32 %v965, 15
    %v982 = vshrl.u32 %v966, 15
    %v983 = vxor.u32 %v951, %v967
    %v984 = vxor.u32 %v952, %v968
    %v985 = vxor.u32 %v953, %v969
    %v986 = vxor.u32 %v954, %v970
    %v987 = vxor.u32 %v955, %v971
    %v988 = vxor.u32 %v956, %v972
    %v989 = vxor.u32 %v957, %v973
    %v990 = vxor.u32 %v958, %v974
    %v991 = vxor.u32 %v959, %v975
    %v992 = vxor.u32 %v960, %v976
    %v993 = vxor.u32 %v961, %v977
    %v994 = vxor.u32 %v962, %v978
    %v995 = vxor.u32 %v963, %v979
    %v996 = vxor.u32 %v964, %v980
    %v997 = vxor.u32 %v965, %v981
    %v998 = vxor.u32 %v966, %v982
    %v999 = vmul.u32 %v983, 2221713035
    %v1000 = vmul.u32 %v984, 2221713035
    %v1001 = vmul.u32 %v985, 2221713035
    %v1002 = vmul.u32 %v986, 2221713035
    %v1003 = vmul.u32 %v987, 2221713035
    %v1004 = vmul.u32 %v988, 2221713035
    %v1005 = vmul.u32 %v989, 2221713035
    %v1006 = vmul.u32 %v990, 2221713035
    %v1007 = vmul.u32 %v991, 2221713035
    %v1008 = vmul.u32 %v992, 2221713035
    %v1009 = vmul.u32 %v993, 2221713035
    %v1010 = vmul.u32 %v994, 2221713035
    %v1011 = vmul.u32 %v995, 2221713035
    %v1012 = vmul.u32 %v996, 2221713035
    %v1013 = vmul.u32 %v997, 2221713035
    %v1014 = vmul.u32 %v998, 2221713035
    %v1015 = vshrl.u32 %v999, 16
    %v1016 = vshrl.u32 %v1000, 16
    %v1017 = vshrl.u32 %v1001, 16
    %v1018 = vshrl.u32 %v1002, 16
    %v1019 = vshrl.u32 %v1003, 16
    %v1020 = vshrl.u32 %v1004, 16
    %v1021 = vshrl.u32 %v1005, 16
    %v1022 = vshrl.u32 %v1006, 16
    %v1023 = vshrl.u32 %v1007, 16
    %v1024 = vshrl.u32 %v1008, 16
    %v1025 = vshrl.u32 %v1009, 16
    %v1026 = vshrl.u32 %v1010, 16
    %v1027 = vshrl.u32 %v1011, 16
    %v1028 = vshrl.u32 %v1012, 16
    %v1029 = vshrl.u32 %v1013, 16
    %v1030 = vshrl.u32 %v1014, 16
    %v1031 = vxor.u32 %v999, %v1015
    %v1032 = vxor.u32 %v1000, %v1016
    %v1033 = vxor.u32 %v1001, %v1017
    %v1034 = vxor.u32 %v1002, %v1018
    %v1035 = vxor.u32 %v1003, %v1019
    %v1036 = vxor.u32 %v1004, %v1020
    %v1037 = vxor.u32 %v1005, %v1021
    %v1038 = vxor.u32 %v1006, %v1022
    %v1039 = vxor.u32 %v1007, %v1023
    %v1040 = vxor.u32 %v1008, %v1024
    %v1041 = vxor.u32 %v1009, %v1025
    %v1042 = vxor.u32 %v1010, %v1026
    %v1043 = vxor.u32 %v1011, %v1027
    %v1044 = vxor.u32 %v1012, %v1028
    %v1045 = vxor.u32 %v1013, %v1029
    %v1046 = vxor.u32 %v1014, %v1030
    %vm1047 = vcmp.ge.u32.totalorder %v1031, 2147483648
    %vm1048 = vcmp.ge.u32.totalorder %v1032, 2147483648
    %vm1049 = vcmp.ge.u32.totalorder %v1033, 2147483648
    %vm1050 = vcmp.ge.u32.totalorder %v1034, 2147483648
    %vm1051 = vcmp.ge.u32.totalorder %v1035, 2147483648
    %vm1052 = vcmp.ge.u32.totalorder %v1036, 2147483648
    %vm1053 = vcmp.ge.u32.totalorder %v1037, 2147483648
    %vm1054 = vcmp.ge.u32.totalorder %v1038, 2147483648
    %vm1055 = vcmp.ge.u32.totalorder %v1039, 2147483648
    %vm1056 = vcmp.ge.u32.totalorder %v1040, 2147483648
    %vm1057 = vcmp.ge.u32.totalorder %v1041, 2147483648
    %vm1058 = vcmp.ge.u32.totalorder %v1042, 2147483648
    %vm1059 = vcmp.ge.u32.totalorder %v1043, 2147483648
    %vm1060 = vcmp.ge.u32.totalorder %v1044, 2147483648
    %vm1061 = vcmp.ge.u32.totalorder %v1045, 2147483648
    %vm1062 = vcmp.ge.u32.totalorder %v1046, 2147483648
    %v1063 = vmul.f32 %v887, 2.0
    %v1064 = vmul.f32 %v888, 2.0
    %v1065 = vmul.f32 %v889, 2.0
    %v1066 = vmul.f32 %v890, 2.0
    %v1067 = vmul.f32 %v891, 2.0
    %v1068 = vmul.f32 %v892, 2.0
    %v1069 = vmul.f32 %v893, 2.0
    %v1070 = vmul.f32 %v894, 2.0
    %v1071 = vmul.f32 %v895, 2.0
    %v1072 = vmul.f32 %v896, 2.0
    %v1073 = vmul.f32 %v897, 2.0
    %v1074 = vmul.f32 %v898, 2.0
    %v1075 = vmul.f32 %v899, 2.0
    %v1076 = vmul.f32 %v900, 2.0
    %v1077 = vmul.f32 %v901, 2.0
    %v1078 = vmul.f32 %v902, 2.0
    %v1079 = vsel %vm1047, %v1063, 0.0
    %v1080 = vsel %vm1048, %v1064, 0.0
    %v1081 = vsel %vm1049, %v1065, 0.0
    %v1082 = vsel %vm1050, %v1066, 0.0
    %v1083 = vsel %vm1051, %v1067, 0.0
    %v1084 = vsel %vm1052, %v1068, 0.0
    %v1085 = vsel %vm1053, %v1069, 0.0
    %v1086 = vsel %vm1054, %v1070, 0.0
    %v1087 = vsel %vm1055, %v1071, 0.0
    %v1088 = vsel %vm1056, %v1072, 0.0
    %v1089 = vsel %vm1057, %v1073, 0.0
    %v1090 = vsel %vm1058, %v1074, 0.0
    %v1091 = vsel %vm1059, %v1075, 0.0
    %v1092 = vsel %vm1060, %v1076, 0.0
    %v1093 = vsel %vm1061, %v1077, 0.0
    %v1094 = vsel %vm1062, %v1078, 0.0
    %v1095 = vpack.c.bf16 %v1080, %v1079
    %v1096 = vpack.c.bf16 %v1082, %v1081
    %v1097 = vpack.c.bf16 %v1084, %v1083
    %v1098 = vpack.c.bf16 %v1086, %v1085
    %v1099 = vpack.c.bf16 %v1088, %v1087
    %v1100 = vpack.c.bf16 %v1090, %v1089
    %v1101 = vpack.c.bf16 %v1092, %v1091
    %v1102 = vpack.c.bf16 %v1094, %v1093
    %v1103 = vld [vmem:[#allocation9] sm:$0xf]
    %v1104 = vld [vmem:[#allocation9 + $0x4] sm:$0xf]
    %v1105 = vld [vmem:[#allocation9 + $0x8] sm:$0xf]
    %v1106 = vld [vmem:[#allocation9 + $0xc] sm:$0xf]
    %v1107 = vld [vmem:[#allocation9 + $0x10] sm:$0xf]
    %v1108 = vld [vmem:[#allocation9 + $0x14] sm:$0xf]
    %v1109 = vld [vmem:[#allocation9 + $0x18] sm:$0xf]
    %v1110 = vld [vmem:[#allocation9 + $0x1c] sm:$0xf]
    %v1111 = vld [vmem:[#allocation9 + $0x20] sm:$0xf]
    %v1112 = vld [vmem:[#allocation9 + $0x24] sm:$0xf]
    %v1113 = vld [vmem:[#allocation9 + $0x28] sm:$0xf]
    %v1114 = vld [vmem:[#allocation9 + $0x2c] sm:$0xf]
    %v1115 = vld [vmem:[#allocation9 + $0x30] sm:$0xf]
    %v1116 = vld [vmem:[#allocation9 + $0x34] sm:$0xf]
    %v1117 = vld [vmem:[#allocation9 + $0x38] sm:$0xf]
    %v1118 = vld [vmem:[#allocation9 + $0x3c] sm:$0xf]
    %v1119 = vld [vmem:[%s7] sm:$0x1]
    %v1121 = vlaneseq
    %v1122 = vshrl.u32 %v1121, 7
    %v1123 = vsub.s32 0, %v1122
    %v1124 = vrot.slane %v1119, %v1123
    %v1142 = vunpack.c.l.b16 %v1103
    %v1143 = vunpack.c.l.b16 %v1104
    %v1144 = vunpack.c.l.b16 %v1105
    %v1145 = vunpack.c.l.b16 %v1106
    %v1146 = vunpack.c.l.b16 %v1107
    %v1147 = vunpack.c.l.b16 %v1108
    %v1148 = vunpack.c.l.b16 %v1109
    %v1149 = vunpack.c.l.b16 %v1110
    %v1150 = vunpack.c.l.b16 %v1111
    %v1151 = vunpack.c.l.b16 %v1112
    %v1152 = vunpack.c.l.b16 %v1113
    %v1153 = vunpack.c.l.b16 %v1114
    %v1154 = vunpack.c.l.b16 %v1115
    %v1155 = vunpack.c.l.b16 %v1116
    %v1156 = vunpack.c.l.b16 %v1117
    %v1157 = vunpack.c.l.b16 %v1118
    %v1158 = vpack.c.b16 %v1143, %v1142
    %v1159 = vpack.c.b16 %v1145, %v1144
    %v1160 = vpack.c.b16 %v1147, %v1146
    %v1161 = vpack.c.b16 %v1149, %v1148
    %v1162 = vpack.c.b16 %v1151, %v1150
    %v1163 = vpack.c.b16 %v1153, %v1152
    %v1164 = vpack.c.b16 %v1155, %v1154
    %v1165 = vpack.c.b16 %v1157, %v1156
    %1174 = vmatprep.subr.bf16.mxu0 0
    %1175 = vmatpush1.bf16.msra.mxu0 %v1158
    %1176 = vmatprep.subr.bf16.mxu0 0
    %1177 = vmatpush1.bf16.msra.mxu0 %v1159
    %1178 = vmatprep.subr.bf16.mxu0 0
    %1179 = vmatpush1.bf16.msra.mxu0 %v1160
    %1180 = vmatprep.subr.bf16.mxu0 0
    %1181 = vmatpush1.bf16.msra.mxu0 %v1161
    %1182 = vmatprep.subr.bf16.mxu0 0
    %1183 = vmatpush1.bf16.msra.mxu0 %v1162
    %1184 = vmatprep.subr.bf16.mxu0 0
    %1185 = vmatpush1.bf16.msra.mxu0 %v1163
    %1186 = vmatprep.subr.bf16.mxu0 0
    %1187 = vmatpush1.bf16.msra.mxu0 %v1164
    %1188 = vmatprep.subr.bf16.mxu0 0
    %1189 = vmatpush1.bf16.msra.mxu0 %v1165
    %1190 = vmatprep.subr.bf16.mxu0 0
    %1191 = vmatpush1.bf16.msra.mxu0 0
    %1192 = vmatprep.subr.bf16.mxu0 0
    %1193 = vmatpush1.bf16.msra.mxu0 0
    %1194 = vmatprep.subr.bf16.mxu0 0
    %1195 = vmatpush1.bf16.msra.mxu0 0
    %1196 = vmatprep.subr.bf16.mxu0 0
    %1197 = vmatpush1.bf16.msra.mxu0 0
    %1198 = vmatprep.subr.bf16.mxu0 0
    %1199 = vmatpush1.bf16.msra.mxu0 0
    %1200 = vmatprep.subr.bf16.mxu0 0
    %1201 = vmatpush1.bf16.msra.mxu0 0
    %1202 = vmatprep.subr.bf16.mxu0 0
    %1203 = vmatpush1.bf16.msra.mxu0 0
    %1204 = vmatprep.subr.bf16.mxu0 0
    %1205 = vmatpush1.bf16.msra.mxu0 0
    %1206 = vmatprep.mubr.bf16.mxu0 0
    %1207 = vmatmul.mubr.bf16.gmra.mrb[0].mxu0 %v1095
    %v1208 = vpop.f32.mrb[0].mxu0
    %v1209 = vadd.f32 %v1124, %v1208
    %v1210 = vpop.f32.mrb[0].mxu0
    %v1211 = vpop.f32.mrb[0].mxu0
    %v1212 = vadd.f32 %v1124, %v1211
    %v1213 = vpop.f32.mrb[0].mxu0
    %1214 = vmatprep.mubr.bf16.mxu0 0
    %1215 = vmatmul.mubr.bf16.gmra.mrb[0].mxu0 %v1096
    %v1216 = vpop.f32.mrb[0].mxu0
    %v1217 = vadd.f32 %v1124, %v1216
    %v1218 = vpop.f32.mrb[0].mxu0
    %v1219 = vpop.f32.mrb[0].mxu0
    %v1220 = vadd.f32 %v1124, %v1219
    %v1221 = vpop.f32.mrb[0].mxu0
    %1222 = vmatprep.mubr.bf16.mxu0 0
    %1223 = vmatmul.mubr.bf16.gmra.mrb[0].mxu0 %v1097
    %v1224 = vpop.f32.mrb[0].mxu0
    %v1225 = vadd.f32 %v1124, %v1224
    %v1226 = vpop.f32.mrb[0].mxu0
    %v1227 = vpop.f32.mrb[0].mxu0
    %v1228 = vadd.f32 %v1124, %v1227
    %v1229 = vpop.f32.mrb[0].mxu0
    %1230 = vmatprep.mubr.bf16.mxu0 0
    %1231 = vmatmul.mubr.bf16.gmra.mrb[0].mxu0 %v1098
    %v1232 = vpop.f32.mrb[0].mxu0
    %v1233 = vadd.f32 %v1124, %v1232
    %v1234 = vpop.f32.mrb[0].mxu0
    %v1235 = vpop.f32.mrb[0].mxu0
    %v1236 = vadd.f32 %v1124, %v1235
    %v1237 = vpop.f32.mrb[0].mxu0
    %1238 = vmatprep.mubr.bf16.mxu0 0
    %1239 = vmatmul.mubr.bf16.gmra.mrb[0].mxu0 %v1099
    %v1240 = vpop.f32.mrb[0].mxu0
    %v1241 = vadd.f32 %v1124, %v1240
    %v1242 = vpop.f32.mrb[0].mxu0
    %v1243 = vpop.f32.mrb[0].mxu0
    %v1244 = vadd.f32 %v1124, %v1243
    %v1245 = vpop.f32.mrb[0].mxu0
    %1246 = vmatprep.mubr.bf16.mxu0 0
    %1247 = vmatmul.mubr.bf16.gmra.mrb[0].mxu0 %v1100
    %v1248 = vpop.f32.mrb[0].mxu0
    %v1249 = vadd.f32 %v1124, %v1248
    %v1250 = vpop.f32.mrb[0].mxu0
    %v1251 = vpop.f32.mrb[0].mxu0
    %v1252 = vadd.f32 %v1124, %v1251
    %v1253 = vpop.f32.mrb[0].mxu0
    %1254 = vmatprep.mubr.bf16.mxu0 0
    %1255 = vmatmul.mubr.bf16.gmra.mrb[0].mxu0 %v1101
    %v1256 = vpop.f32.mrb[0].mxu0
    %v1257 = vadd.f32 %v1124, %v1256
    %v1258 = vpop.f32.mrb[0].mxu0
    %v1259 = vpop.f32.mrb[0].mxu0
    %v1260 = vadd.f32 %v1124, %v1259
    %v1261 = vpop.f32.mrb[0].mxu0
    %1262 = vmatprep.mubr.bf16.mxu0 0
    %1263 = vmatmul.mubr.bf16.gmra.mrb[0].mxu0 %v1102
    %v1264 = vpop.f32.mrb[0].mxu0
    %v1265 = vadd.f32 %v1124, %v1264
    %v1266 = vpop.f32.mrb[0].mxu0
    %v1267 = vpop.f32.mrb[0].mxu0
    %v1268 = vadd.f32 %v1124, %v1267
    %v1269 = vpop.f32.mrb[0].mxu0
    %1270 = vdwg.mxu0
    %1271 = vst [vmem:[#allocation11] sm:$0xff] %v1209
    %1272 = vst [vmem:[#allocation11 + $0x8] sm:$0xff] %v1212
    %1273 = vst [vmem:[#allocation11 + $0x10] sm:$0xff] %v1217
    %1274 = vst [vmem:[#allocation11 + $0x18] sm:$0xff] %v1220
    %1275 = vst [vmem:[#allocation11 + $0x20] sm:$0xff] %v1225
    %1276 = vst [vmem:[#allocation11 + $0x28] sm:$0xff] %v1228
    %1277 = vst [vmem:[#allocation11 + $0x30] sm:$0xff] %v1233
    %1278 = vst [vmem:[#allocation11 + $0x38] sm:$0xff] %v1236
    %1279 = vst [vmem:[#allocation11 + $0x40] sm:$0xff] %v1241
    %1280 = vst [vmem:[#allocation11 + $0x48] sm:$0xff] %v1244
    %1281 = vst [vmem:[#allocation11 + $0x50] sm:$0xff] %v1249
    %1282 = vst [vmem:[#allocation11 + $0x58] sm:$0xff] %v1252
    %1283 = vst [vmem:[#allocation11 + $0x60] sm:$0xff] %v1257
    %1284 = vst [vmem:[#allocation11 + $0x68] sm:$0xff] %v1260
    %1285 = vst [vmem:[#allocation11 + $0x70] sm:$0xff] %v1265
    %1286 = vst [vmem:[#allocation11 + $0x78] sm:$0xff] %v1268
    // Predicated region
    $region50: #{tpu_custom_call.1} parent=1 // pred_check
      _
    $region51: #{tpu_custom_call.1} parent=1 // pred_check_branch
      %1288 = sbr.rel (0) target = $region53
    $region52: #{tpu_custom_call.1} parent=1 // pred_region
      %s1290 = ssub.s32 2048, 2048
      %1291 = vsyncadd [#allocation5], %s1290
      %s1292 = sshll.u32 [#allocation11], 4
      %s1293 = int_to_ptr.vmem [resolvable:$true] %s1292
      %1298 = dma.vmem_to_hbm [thread:$0]  %s1293, 2048, %s8, [#allocation5], 128, 128, 8
    $region53: #{tpu_custom_call.1} parent=1 // pred_fallthru
      _
    // Predicated region
    $region54: #{tpu_custom_call.1} parent=1 // pred_check
      _
    $region55: #{tpu_custom_call.1} parent=1 // pred_check_branch
      %1300 = sbr.rel (0) target = $region57
    $region56: #{tpu_custom_call.1} parent=1 // pred_region
      %1301 = dma.done [#allocation5], 2048
    $region57: #{tpu_custom_call.1} parent=1 // pred_fallthru
      _
    %1302 = vsyncpa [#allocation4], 1
    %1303 = vsyncpa [#allocation7], 1
    %1304 = vsyncpa [#allocation10], 1
    %1305 = vsyncpa [#allocation5], 1

</llo_original>
